<compile_context>
chip_gen: v6e
topology: v6e:2x2x1
jax: 0.10.0
libtpu: 0.0.40
codegen_flags: <defaults>
</compile_context>

<pallas_src>
import functools

import jax
import jax.numpy as jnp
from jax.experimental import pallas as pl
from jax.experimental.pallas import tpu as pltpu


def _round_up(a, b):
    return ((a + b - 1) // b) * b


def gbn_kernel(x_ref, gamma_ref, beta_ref, o_ref, *, eps, inv_n):
    """One grid step == one (ghost batch, channel tile) block."""
    x = x_ref[...].astype(jnp.float32)                       # (chunk, TC)
    # One-pass per-channel batch statistics over this ghost batch.
    s1 = jnp.sum(x, axis=0, keepdims=True)                   # (1, TC)
    s2 = jnp.sum(x * x, axis=0, keepdims=True)                # (1, TC)
    mean = s1 * inv_n
    # Biased variance via E[x^2] - mean^2 (clamped for numerical safety).
    var = jnp.maximum(s2 * inv_n - mean * mean, 0.0)
    inv_std = jax.lax.rsqrt(var + eps)                        # (1, TC)
    # Fold the affine into per-channel scale/shift: full-tile pass is mul+add.
    scale = inv_std * gamma_ref[...]                          # (1, TC)
    shift = beta_ref[...] - mean * scale                      # (1, TC)
    o_ref[...] = (x * scale + shift).astype(o_ref.dtype)


def gbn_forward(x, gamma, beta, *, vbs=1024, eps=1e-5, max_channel_tile=1024):
    """Ghost Batch Norm forward.

    Mirrors GBN.forward:
      - if N <= vbs: one BN over the whole batch
      - else: split into N // vbs chunks along the batch axis, BN each chunk.
    """
    N, C = x.shape
    LANE = 128
    itemsize = jnp.dtype(x.dtype).itemsize
    sublane = max(8, 32 // itemsize)            # 8 for f32, 16 for bf16

    if N <= vbs:
        n_chunks, chunk = 1, N                  # full-dim block rows: any N ok
    else:
        assert N % vbs == 0, "N must be divisible by vbs (even-chunk case only)"
        assert vbs % sublane == 0, (
            f"vbs must be a multiple of {sublane} sublanes for dtype {x.dtype}")
        n_chunks, chunk = N // vbs, vbs

    # ---- Channel tile: pick the tile first, grid = cdiv(C, tc). ------------
    # Budget: keep the (chunk, tc) working set (double-buffered in/out blocks
    # plus in-kernel f32 temporaries) well inside v7x's 64 MiB per-core VMEM.
    max_block_elems = 3 * (1 << 19)             # ~1.5M elems ~= 6 MiB f32/block
    c_lanes = _round_up(C, LANE)
    tc = LANE
    for cand in (1024, 512, 256, 128):
        if cand <= max_channel_tile and cand <= c_lanes and chunk * cand <= max_block_elems:
            tc = cand
            break
    # v7x megacore: with a single ghost batch, ensure >= 2 channel tiles
    # whenever C spans more than one lane group so both TensorCores get work.
    if n_chunks == 1 and tc >= c_lanes and c_lanes > LANE:
        for cand in (512, 256, 128):
            if cand < c_lanes:
                tc = min(tc, cand)
                break
    # Ragged C that fits in a single tile: use the exact channel count as the
    # block width (allowed when equal to the full array dim) -> no masked lanes.
    if C < tc and C % LANE != 0:
        tc = C
    n_ctiles = pl.cdiv(C, tc)

    # ---- Parameters: tiny (1, C) vectors; pad only these (never x). --------
    c_param = n_ctiles * tc
    gamma2d = gamma.reshape(1, C).astype(jnp.float32)
    beta2d = beta.reshape(1, C).astype(jnp.float32)
    if c_param != C:
        gamma2d = jnp.pad(gamma2d, ((0, 0), (0, c_param - C)), constant_values=1.0)
        beta2d = jnp.pad(beta2d, ((0, 0), (0, c_param - C)))

    # ---- VMEM limit: actual need, capped for v7x's 64 MiB per-core VMEM. ---
    block_bytes = chunk * tc * itemsize
    vmem_need = 4 * block_bytes + 3 * chunk * tc * 4 + (2 << 20)
    vmem_limit = int(min(48 << 20, max(32 << 20, vmem_need)))

    cost = pl.CostEstimate(
        flops=8 * N * C,
        transcendentals=n_chunks * C,
        bytes_accessed=2 * N * C * itemsize + 2 * C * 4,
    )

    out = pl.pallas_call(
        functools.partial(gbn_kernel, eps=eps, inv_n=1.0 / chunk),
        out_shape=jax.ShapeDtypeStruct((N, C), x.dtype),
        grid=(n_chunks, n_ctiles),
        in_specs=[
            pl.BlockSpec((chunk, tc), lambda i, j: (i, j)),   # ghost batch x channel tile
            pl.BlockSpec((1, tc), lambda i, j: (0, j)),       # shared weight tile
            pl.BlockSpec((1, tc), lambda i, j: (0, j)),       # shared bias tile
        ],
        out_specs=pl.BlockSpec((chunk, tc), lambda i, j: (i, j)),
        compiler_params=pltpu.CompilerParams(
            dimension_semantics=("parallel", "parallel"),
            vmem_limit_bytes=vmem_limit,
        ),
        cost_estimate=cost,
    )(x, gamma2d, beta2d)
    return out


def gbn_reference(x, gamma, beta, *, vbs, eps=1e-5):
    """Pure-JAX reference for verification (two-pass, f32)."""
    x = x.astype(jnp.float32)
    N, C = x.shape
    if N <= vbs:
        chunks = [x]
    else:
        chunks = jnp.split(x, N // vbs, axis=0)
    outs = []
    for y in chunks:
        m = jnp.mean(y, axis=0, keepdims=True)
        v = jnp.mean((y - m) ** 2, axis=0, keepdims=True)
        outs.append((y - m) / jnp.sqrt(v + eps) * gamma[None, :] + beta[None, :])
    return jnp.concatenate(outs, axis=0)


if __name__ == "__main__":
    key = jax.random.PRNGKey(0)
    kx, kg, kb = jax.random.split(key, 3)

    # ---- Case 1: multiple ghost batches AND multiple channel tiles. -------
    N, C, VBS = 16, 256, 8          # 2 ghost batches; force TC=128 -> 2 channel tiles
    x = jax.random.normal(kx, (N, C), dtype=jnp.float32)
    gamma = 1.0 + 0.1 * jax.random.normal(kg, (C,), dtype=jnp.float32)
    beta = 0.1 * jax.random.normal(kb, (C,), dtype=jnp.float32)

    out = jax.block_until_ready(
        gbn_forward(x, gamma, beta, vbs=VBS, max_channel_tile=128))
    ref = gbn_reference(x, gamma, beta, vbs=VBS)
    assert out.shape == (N, C)
    assert jnp.allclose(out, ref, atol=1e-5, rtol=1e-5), "mismatch vs reference"

    # ---- Case 2: N <= vbs path (single BN, channel axis split for megacore).
    out_small = jax.block_until_ready(gbn_forward(x, gamma, beta, vbs=1024))
    ref_small = gbn_reference(x, gamma, beta, vbs=1024)
    assert jnp.allclose(out_small, ref_small, atol=1e-5, rtol=1e-5)

    # ---- Case 3: ragged channel count (C=96): no pad/slice of x in HBM. ----
    C2 = 96
    x2 = jax.random.normal(kx, (N, C2), dtype=jnp.float32)
    gamma2 = 1.0 + 0.1 * jax.random.normal(kg, (C2,), dtype=jnp.float32)
    beta2 = 0.1 * jax.random.normal(kb, (C2,), dtype=jnp.float32)
    out2 = jax.block_until_ready(gbn_forward(x2, gamma2, beta2, vbs=VBS))
    ref2 = gbn_reference(x2, gamma2, beta2, vbs=VBS)
    assert out2.shape == (N, C2)
    assert jnp.allclose(out2, ref2, atol=1e-5, rtol=1e-5)

    # ---- Case 4: bf16 I/O (stats still accumulate in f32 inside kernel). ---
    Nb, VBSb = 32, 16               # chunk=16 satisfies bf16 sublane multiple
    xb = jax.random.normal(kx, (Nb, C), dtype=jnp.float32).astype(jnp.bfloat16)
    outb = jax.block_until_ready(gbn_forward(xb, gamma, beta, vbs=VBSb))
    refb = gbn_reference(xb.astype(jnp.float32), gamma, beta, vbs=VBSb)
    assert outb.dtype == jnp.bfloat16
    assert jnp.allclose(outb.astype(jnp.float32), refb, atol=2e-2, rtol=2e-2)

    print("KERNEL_OK")
</pallas_src>

<mosaic_0001>
module attributes {stable_mosaic.version = 11 : i64} {
  func.func @gbn_kernel(%arg0: i32, %arg1: i32, %arg2: memref<8x128xf32, #tpu.memory_space<vmem>>, %arg3: memref<1x128xf32, #tpu.memory_space<vmem>>, %arg4: memref<1x128xf32, #tpu.memory_space<vmem>>, %arg5: memref<8x128xf32, #tpu.memory_space<vmem>>) attributes {dimension_semantics = [#tpu.dimension_semantics<parallel>, #tpu.dimension_semantics<parallel>], iteration_bounds = array<i64: 2, 2>, scalar_prefetch = 0 : i64, scratch_operands = 0 : i64, tpu.core_type = #tpu.core_type<tc>, window_params = [{transform_indices = @transform_0, window_bounds = array<i64: 8, 128>}, {transform_indices = @transform_1, window_bounds = array<i64: 1, 128>}, {transform_indices = @transform_2, window_bounds = array<i64: 1, 128>}, {transform_indices = @transform_3, window_bounds = array<i64: 8, 128>}]} {
    %c0 = arith.constant 0 : index
    %c0_0 = arith.constant 0 : index
    %0 = vector.load %arg2[%c0, %c0_0] : memref<8x128xf32, #tpu.memory_space<vmem>>, vector<8x128xf32>
    %cst = arith.constant dense<0.000000e+00> : vector<128xf32>
    %1 = vector.multi_reduction <add>, %0, %cst [0] : vector<8x128xf32> to vector<128xf32>
    %2 = vector.shape_cast %1 : vector<128xf32> to vector<1x128xf32>
    %3 = arith.mulf %0, %0 : vector<8x128xf32>
    %cst_1 = arith.constant dense<0.000000e+00> : vector<128xf32>
    %4 = vector.multi_reduction <add>, %3, %cst_1 [0] : vector<8x128xf32> to vector<128xf32>
    %5 = vector.shape_cast %4 : vector<128xf32> to vector<1x128xf32>
    %cst_2 = arith.constant 1.250000e-01 : f32
    %6 = vector.broadcast %cst_2 : f32 to vector<1x128xf32>
    %7 = arith.mulf %2, %6 : vector<1x128xf32>
    %cst_3 = arith.constant 1.250000e-01 : f32
    %8 = vector.broadcast %cst_3 : f32 to vector<1x128xf32>
    %9 = arith.mulf %5, %8 : vector<1x128xf32>
    %10 = arith.mulf %7, %7 : vector<1x128xf32>
    %11 = arith.subf %9, %10 : vector<1x128xf32>
    %cst_4 = arith.constant 0.000000e+00 : f32
    %12 = vector.broadcast %cst_4 : f32 to vector<1x128xf32>
    %13 = arith.maximumf %11, %12 : vector<1x128xf32>
    %cst_5 = arith.constant 9.99999974E-6 : f32
    %14 = vector.broadcast %cst_5 : f32 to vector<1x128xf32>
    %15 = arith.addf %13, %14 : vector<1x128xf32>
    %16 = math.rsqrt %15 : vector<1x128xf32>
    %c0_6 = arith.constant 0 : index
    %c0_7 = arith.constant 0 : index
    %17 = vector.load %arg3[%c0_6, %c0_7] : memref<1x128xf32, #tpu.memory_space<vmem>>, vector<1x128xf32>
    %18 = arith.mulf %16, %17 : vector<1x128xf32>
    %c0_8 = arith.constant 0 : index
    %c0_9 = arith.constant 0 : index
    %19 = vector.load %arg4[%c0_8, %c0_9] : memref<1x128xf32, #tpu.memory_space<vmem>>, vector<1x128xf32>
    %20 = arith.mulf %7, %18 : vector<1x128xf32>
    %21 = arith.subf %19, %20 : vector<1x128xf32>
    %22 = vector.broadcast %18 : vector<1x128xf32> to vector<8x128xf32>
    %23 = arith.mulf %0, %22 : vector<8x128xf32>
    %24 = vector.broadcast %21 : vector<1x128xf32> to vector<8x128xf32>
    %25 = arith.addf %23, %24 : vector<8x128xf32>
    %c0_10 = arith.constant 0 : index
    %c0_11 = arith.constant 0 : index
    %26 = vector.load %arg5[%c0_10, %c0_11] : memref<8x128xf32, #tpu.memory_space<vmem>>, vector<8x128xf32>
    tpu.vector_store %arg5[%c0_10, %c0_11], %25 {strides = array<i32>} : memref<8x128xf32, #tpu.memory_space<vmem>>, vector<8x128xf32>,
    return
  }
  func.func @transform_0(%arg0: i32, %arg1: i32) -> (i32, i32) {
    %c0_i32 = arith.constant 0 : i32
    return %arg0, %arg1 : i32, i32
  }
  func.func @transform_1(%arg0: i32, %arg1: i32) -> (i32, i32) {
    %c0_i32 = arith.constant 0 : i32
    %c0_i32_0 = arith.constant 0 : i32
    return %c0_i32, %arg1 : i32, i32
  }
  func.func @transform_2(%arg0: i32, %arg1: i32) -> (i32, i32) {
    %c0_i32 = arith.constant 0 : i32
    %c0_i32_0 = arith.constant 0 : i32
    return %c0_i32, %arg1 : i32, i32
  }
  func.func @transform_3(%arg0: i32, %arg1: i32) -> (i32, i32) {
    %c0_i32 = arith.constant 0 : i32
    return %arg0, %arg1 : i32, i32
  }
}

</mosaic_0001>

<llo_original>
// kernel: tpu_custom_call.1
$region0: #{tpu_custom_call.1}
  #allocation0 [shape = 'u32[]', space=smem, size = 0x4, offset = 0x4, fixed_abs, tag = 'smem constant byte address 0x4 - core index']
  #allocation1 [shape = 'u32[144,128]{1,0:T(1,128)}', space=vmem, size = 0x12000, scoped, tag = 'internal scratch']
  %s0 = inlined_call_operand.hbm [shape: f32[16,256], index: 0, kind: input, shape index: {}]
  %s1 = inlined_call_operand.hbm [shape: f32[1,256], index: 1, kind: input, shape index: {}]
  %s2 = inlined_call_operand.vmem [shape: f32[1,256], index: 2, kind: input, shape index: {}]
  %s3 = inlined_call_operand.hbm [shape: f32[16,256], index: 3, kind: output, shape index: {}]
  %s4 = sld [smem:[#allocation0]]
  $region53: #{tpu_custom_call.1} parent=0
    _
  %s6 = ssub.s32 1, %s4
  %s7 = scalar_select 0, %s6, %s4
  $region1: #{tpu_custom_call.1} parent=0
    #allocation2 [shape = 'u8[8192]{0}', space=vmem, size = 0x2000, scoped, tag = 'input window, operand 0']
    #allocation3 [shape = 's32[2]{0}', space=sflag, size = 0x8, scoped, tag = 'scoped memory for tpu_custom_call.1']
    #allocation4 [shape = 's32[2]{0}', space=sflag, size = 0x8, scoped, tag = 'scoped memory for tpu_custom_call.1']
    #allocation5 [shape = 'u8[1024]{0}', space=vmem, size = 0x400, scoped, tag = 'input window, operand 1']
    #allocation6 [shape = 's32[2]{0}', space=sflag, size = 0x8, scoped, tag = 'scoped memory for tpu_custom_call.1']
    #allocation7 [shape = 'u8[8192]{0}', space=vmem, size = 0x2000, scoped, tag = 'output window, operand 0']
    %8 = vsyncpa [#allocation3], 0
    %s9 = scalar_lea.sflag [#allocation3], 1
    %10 = vsyncpa %s9, 0
    %11 = vsyncpa [#allocation6], 0
    %s12 = scalar_lea.sflag [#allocation6], 1
    %13 = vsyncpa %s12, 0
    %14 = vsyncpa [#allocation4], 0
    %s15 = scalar_lea.sflag [#allocation4], 1
    %16 = vsyncpa %s15, 0
    loop: start=0, step=1, limit=6
    $region2: #{tpu_custom_call.1} parent=1 // loop_pre_header
      _
    $region3: #{tpu_custom_call.1} parent=1 // loop_header
      %s18 = sphi 0, %s22
      %p19 = scmp.ge.s32.totalorder %s18, 6
      %s25 = sphi 0, %s37
      %s26 = sphi 0, %s33
      %s27 = sphi 0, %s25
      %s28 = sphi 0, %s26
      %s29 = sphi 0, %s27
      %s30 = sphi 0, %s28
      %s42 = sphi 0, %s44
      %s45 = sphi 0, %s42
      %s46 = sphi 0, %s45
      %s62 = sphi 0, %s46
      %s68 = sphi 0, %s70
      %s71 = sphi 0, %s68
      %s72 = sphi 0, %s71
      %s88 = sphi 0, %s72
      %s94 = sphi 0, %s96
      %s97 = sphi 0, %s94
      %s98 = sphi 0, %s97
      %s114 = sphi 0, %s98
      %s122 = sphi 0, %s124
      %s125 = sphi 0, %s122
      %s126 = sphi 0, %s125
      %s142 = sphi 0, %s126
    $region4: #{tpu_custom_call.1} parent=1 // loop_header_branch
      %21 = sbr.rel (%p19) target = $region8
    $region5: #{tpu_custom_call.1} parent=1 // loop_body
      %s23 = ssub.s32 %s18, 1
      %s24 = ssub.s32 %s18, 2
      %s31 = sadd.s32 1, %s26
      %p32 = scmp.ge.s32.totalorder %s31, 2
      %s33 = scalar_select %p32, 0, %s31
      %s34 = sadd.s32 1, %s25
      %s35 = scalar_select %p32, %s34, %s25
      %p36 = scmp.ge.s32.totalorder %s35, 2
      %s37 = scalar_select %p36, 0, %s35
      %s38 = ssub.s32 %s25, %s37
      %s39 = ssub.s32 %s26, %s33
      %s40 = sor.u32 %s38, %s39
      %p41 = scmp.eq.s32.totalorder %s40, 0
      %s43 = sadd.s32 %s42, 1
      %s44 = scalar_select %p41, %s42, %s43
      %p47 = pneg %p41
      %p48 = scmp.eq.s32.totalorder %s18, 3
      %p49 = por %p47, %p48
      %p50 = scmp.ne.s32.totalorder %s42, %s45
      %p51 = scmp.eq.s32.totalorder %s18, 0
      %p52 = por %p50, %p51
      %p53 = scmp.ne.s32.totalorder %s42, %s45
      %p54 = scmp.eq.s32.totalorder %s23, 3
      %p55 = por %p53, %p54
      %p56 = scmp.ne.s32.totalorder %s45, %s46
      %p57 = scmp.eq.s32.totalorder %s23, 0
      %p58 = por %p56, %p57
      %p59 = scmp.ne.s32.totalorder %s45, %s46
      %p60 = scmp.eq.s32.totalorder %s24, 3
      %p61 = por %p59, %p60
      %p63 = scmp.ne.s32.totalorder %s46, %s62
      %p64 = scmp.eq.s32.totalorder %s24, 0
      %p65 = por %p63, %p64
      %s66 = ssub.s32 %s26, %s33
      %p67 = scmp.eq.s32.totalorder %s66, 0
      %s69 = sadd.s32 %s68, 1
      %s70 = scalar_select %p67, %s68, %s69
      %p73 = pneg %p67
      %p74 = scmp.eq.s32.totalorder %s18, 3
      %p75 = por %p73, %p74
      %p76 = scmp.ne.s32.totalorder %s68, %s71
      %p77 = scmp.eq.s32.totalorder %s18, 0
      %p78 = por %p76, %p77
      %p79 = scmp.ne.s32.totalorder %s68, %s71
      %p80 = scmp.eq.s32.totalorder %s23, 3
      %p81 = por %p79, %p80
      %p82 = scmp.ne.s32.totalorder %s71, %s72
      %p83 = scmp.eq.s32.totalorder %s23, 0
      %p84 = por %p82, %p83
      %p85 = scmp.ne.s32.totalorder %s71, %s72
      %p86 = scmp.eq.s32.totalorder %s24, 3
      %p87 = por %p85, %p86
      %p89 = scmp.ne.s32.totalorder %s72, %s88
      %p90 = scmp.eq.s32.totalorder %s24, 0
      %p91 = por %p89, %p90
      %s92 = ssub.s32 %s26, %s33
      %p93 = scmp.eq.s32.totalorder %s92, 0
      %s95 = sadd.s32 %s94, 1
      %s96 = scalar_select %p93, %s94, %s95
      %p99 = pneg %p93
      %p100 = scmp.eq.s32.totalorder %s18, 3
      %p101 = por %p99, %p100
      %p102 = scmp.ne.s32.totalorder %s94, %s97
      %p103 = scmp.eq.s32.totalorder %s18, 0
      %p104 = por %p102, %p103
      %p105 = scmp.ne.s32.totalorder %s94, %s97
      %p106 = scmp.eq.s32.totalorder %s23, 3
      %p107 = por %p105, %p106
      %p108 = scmp.ne.s32.totalorder %s97, %s98
      %p109 = scmp.eq.s32.totalorder %s23, 0
      %p110 = por %p108, %p109
      %p111 = scmp.ne.s32.totalorder %s97, %s98
      %p112 = scmp.eq.s32.totalorder %s24, 3
      %p113 = por %p111, %p112
      %p115 = scmp.ne.s32.totalorder %s98, %s114
      %p116 = scmp.eq.s32.totalorder %s24, 0
      %p117 = por %p115, %p116
      %s118 = ssub.s32 %s25, %s37
      %s119 = ssub.s32 %s26, %s33
      %s120 = sor.u32 %s118, %s119
      %p121 = scmp.eq.s32.totalorder %s120, 0
      %s123 = sadd.s32 %s122, 1
      %s124 = scalar_select %p121, %s122, %s123
      %p127 = pneg %p121
      %p128 = scmp.eq.s32.totalorder %s18, 3
      %p129 = por %p127, %p128
      %p130 = scmp.ne.s32.totalorder %s122, %s125
      %p131 = scmp.eq.s32.totalorder %s18, 0
      %p132 = por %p130, %p131
      %p133 = scmp.ne.s32.totalorder %s122, %s125
      %p134 = scmp.eq.s32.totalorder %s23, 3
      %p135 = por %p133, %p134
      %p136 = scmp.ne.s32.totalorder %s125, %s126
      %p137 = scmp.eq.s32.totalorder %s23, 0
      %p138 = por %p136, %p137
      %p139 = scmp.ne.s32.totalorder %s125, %s126
      %p140 = scmp.eq.s32.totalorder %s24, 3
      %p141 = por %p139, %p140
      %p143 = scmp.ne.s32.totalorder %s126, %s142
      %p144 = scmp.eq.s32.totalorder %s24, 0
      %p145 = por %p143, %p144
      %p146 = scmp.le.s32.totalorder 1, %s18
      %p147 = scmp.lt.s32.totalorder %s18, 5
      %p148 = pnand %p146, %p147
      %p149 = pneg %p148
      // Predicated region
      $region9: #{tpu_custom_call.1} parent=5 // pred_check
        _
      $region10: #{tpu_custom_call.1} parent=5 // pred_check_branch
        %151 = sbr.rel (%p148) target = $region12
      $region11: #{tpu_custom_call.1} parent=5 // pred_region
        %s152 = ssub.s32 %s18, 1
      $region12: #{tpu_custom_call.1} parent=5 // pred_fallthru
        _
      %p153 = scmp.lt.s32.totalorder %s18, 4
      // Predicated region
      $region13: #{tpu_custom_call.1} parent=5 // pred_check
        %p154 = pneg %p153
      $region14: #{tpu_custom_call.1} parent=5 // pred_check_branch
        %156 = sbr.rel (%p154) target = $region16
      $region15: #{tpu_custom_call.1} parent=5 // pred_region
        // Predicated region
        $region17: #{tpu_custom_call.1} parent=15 // pred_check
          %p157 = pneg %p52
        $region18: #{tpu_custom_call.1} parent=15 // pred_check_branch
          %159 = sbr.rel (%p157) target = $region20
        $region19: #{tpu_custom_call.1} parent=15 // pred_region
          %s160 = sand.u32 %s42, 1
          %s161 = scalar_lea.sflag [#allocation3], %s160
          %s162 = sand.u32 %s42, 1
          %s163 = smul.addr %s162, 8
          %s164 = scalar_lea.vmem [#allocation2], %s163
          %s166 = ssub.s32 128, 128
          %167 = vsyncadd %s161, %s166
          %s168 = smul.addr %s25, 2
          %s169 = sadd.s32 %s26, %s168
          %s170 = smul.addr %s169, 128
          %s171 = scalar_lea.hbm %s0, %s170
          %s173 = sshll.u32 %s164, 4
          %s174 = int_to_ptr.vmem [resolvable:$true] %s173
          %176 = dma.hbm_to_vmem [thread:$0]  %s171, 128, %s174, %s161
        $region20: #{tpu_custom_call.1} parent=15 // pred_fallthru
          _
        // Predicated region
        $region21: #{tpu_custom_call.1} parent=15 // pred_check
          %p177 = pneg %p78
        $region22: #{tpu_custom_call.1} parent=15 // pred_check_branch
          %179 = sbr.rel (%p177) target = $region24
        $region23: #{tpu_custom_call.1} parent=15 // pred_region
          %s180 = sand.u32 %s68, 1
          %s181 = scalar_lea.sflag [#allocation6], %s180
          %s182 = sand.u32 %s68, 1
          %s183 = scalar_lea.vmem [#allocation5], %s182
          %s185 = ssub.s32 16, 16
          %186 = vsyncadd %s181, %s185
          %s187 = smul.addr %s26, 16
          %s188 = scalar_lea.hbm %s1, %s187
          %s190 = sshll.u32 %s183, 4
          %s191 = int_to_ptr.vmem [resolvable:$true] %s190
          %193 = dma.hbm_to_vmem [thread:$0]  %s188, 16, %s191, %s181
        $region24: #{tpu_custom_call.1} parent=15 // pred_fallthru
          _
        // Predicated region
        $region25: #{tpu_custom_call.1} parent=15 // pred_check
          %p194 = pneg %p104
        $region26: #{tpu_custom_call.1} parent=15 // pred_check_branch
          %196 = sbr.rel (%p194) target = $region28
        $region27: #{tpu_custom_call.1} parent=15 // pred_region
          %p197 = scmp.lt.s32.totalorder %s26, 1
          %s198 = scalar_select %p197, %s26, 1
          %s199 = scalar_lea.vmem %s2, %s198
        $region28: #{tpu_custom_call.1} parent=15 // pred_fallthru
          _
      $region16: #{tpu_custom_call.1} parent=5 // pred_fallthru
        _
      %p200 = scmp.le.s32.totalorder 1, %s18
      %p201 = scmp.lt.s32.totalorder %s18, 5
      %p202 = pnand %p200, %p201
      %p203 = pneg %p202
      // Predicated region
      $region29: #{tpu_custom_call.1} parent=5 // pred_check
        _
      $region30: #{tpu_custom_call.1} parent=5 // pred_check_branch
        %205 = sbr.rel (%p202) target = $region32
      $region31: #{tpu_custom_call.1} parent=5 // pred_region
        %s206 = ssub.s32 %s18, 1
        %s207 = sand.u32 %s45, 1
        %s208 = scalar_lea.sflag [#allocation3], %s207
        %s209 = sand.u32 %s45, 1
        %s210 = smul.addr %s209, 8
        %s211 = scalar_lea.vmem [#allocation2], %s210
        // Predicated region
        $region33: #{tpu_custom_call.1} parent=31 // pred_check
          %p212 = pneg %p58
        $region34: #{tpu_custom_call.1} parent=31 // pred_check_branch
          %214 = sbr.rel (%p212) target = $region36
        $region35: #{tpu_custom_call.1} parent=31 // pred_region
          %215 = dma.done %s208, 128
        $region36: #{tpu_custom_call.1} parent=31 // pred_fallthru
          _
        %s216 = sand.u32 %s71, 1
        %s217 = scalar_lea.sflag [#allocation6], %s216
        %s218 = sand.u32 %s71, 1
        %s219 = scalar_lea.vmem [#allocation5], %s218
        // Predicated region
        $region37: #{tpu_custom_call.1} parent=31 // pred_check
          %p220 = pneg %p84
        $region38: #{tpu_custom_call.1} parent=31 // pred_check_branch
          %222 = sbr.rel (%p220) target = $region40
        $region39: #{tpu_custom_call.1} parent=31 // pred_region
          %223 = dma.done %s217, 16
        $region40: #{tpu_custom_call.1} parent=31 // pred_fallthru
          _
        %s224 = sand.u32 %s45, 1
        %s225 = scalar_lea.sflag [#allocation3], %s224
        %s226 = sand.u32 %s45, 1
        %s227 = smul.addr %s226, 8
        %s228 = scalar_lea.vmem [#allocation2], %s227
        %p229 = pneg %p58
        %p230 = pneg %p55
        %s231 = sand.u32 %s71, 1
        %s232 = scalar_lea.sflag [#allocation6], %s231
        %s233 = sand.u32 %s71, 1
        %s234 = scalar_lea.vmem [#allocation5], %s233
        %p235 = pneg %p84
        %p236 = pneg %p81
        %p237 = scmp.lt.s32.totalorder %s28, 1
        %s238 = scalar_select %p237, %s28, 1
        %s239 = scalar_lea.vmem %s2, %s238
        %p240 = pneg %p110
        %p241 = pneg %p107
        %p242 = pneg %p138
        %p243 = pneg %p135
        %s244 = sand.u32 %s125, 1
        %s245 = scalar_lea.sflag [#allocation4], %s244
        %s246 = sand.u32 %s125, 1
        %s247 = smul.addr %s246, 8
        %s248 = scalar_lea.vmem [#allocation7], %s247
        %p249 = scmp.lt.s32.totalorder %s28, 1
        %s250 = scalar_select %p249, %s28, 1
        %s251 = scalar_lea.vmem %s2, %s250
        %v252 = vld [vmem:[%s211] sm:$0xff]
        %v253 = vrot.slane %v252, 4
        %v254 = vadd.f32 %v252, %v253
        %v255 = vrot.slane %v254, 2
        %v256 = vadd.f32 %v254, %v255
        %v257 = vrot.slane %v256, 1
        %v258 = vadd.f32 %v256, %v257
        %v259 = vmul.f32 %v252, %v252
        %v260 = vrot.slane %v259, 4
        %v261 = vadd.f32 %v259, %v260
        %v262 = vrot.slane %v261, 2
        %v263 = vadd.f32 %v261, %v262
        %v264 = vrot.slane %v263, 1
        %v265 = vadd.f32 %v263, %v264
        %v266 = vmul.f32 %v258, 0.125
        %v267 = vmul.f32 %v265, 0.125
        %v268 = vmul.f32 %v266, %v266
        %v269 = vsub.f32 %v267, %v268
        %v270 = vmax.f32 %v269, 0.0
        %v271 = vadd.f32 %v270, 1e-05
        %v272 = vrsqrt.pop %v271
        %v273 = vld [vmem:[%s219] sm:$0x1]
        %v274 = vmul.f32 %v272, %v273
        %v275 = vld [vmem:[%s251] sm:$0x1]
        %v276 = vmul.f32 %v266, %v274
        %v277 = vsub.f32 %v275, %v276
        %v278 = vlaneseq
        %v279 = vshrl.u32 %v278, 7
        %v280 = vsub.s32 0, %v279
        %v281 = vrot.slane %v274, %v280
        %v282 = vmul.f32 %v252, %v281
        %v284 = vlaneseq
        %v285 = vshrl.u32 %v284, 7
        %v286 = vsub.s32 0, %v285
        %v287 = vrot.slane %v277, %v286
        %v289 = vadd.f32 %v282, %v287
        %290 = vst [vmem:[%s248] sm:$0xff] %v289
        %s291 = sand.u32 %s125, 1
        %s292 = scalar_lea.sflag [#allocation4], %s291
        %s293 = sand.u32 %s125, 1
        %s294 = smul.addr %s293, 8
        %s295 = scalar_lea.vmem [#allocation7], %s294
        // Predicated region
        $region41: #{tpu_custom_call.1} parent=31 // pred_check
          %p296 = pneg %p135
        $region42: #{tpu_custom_call.1} parent=31 // pred_check_branch
          %298 = sbr.rel (%p296) target = $region44
        $region43: #{tpu_custom_call.1} parent=31 // pred_region
          %s300 = ssub.s32 128, 128
          %301 = vsyncadd %s292, %s300
          %s302 = smul.addr %s27, 2
          %s303 = sadd.s32 %s28, %s302
          %s304 = smul.addr %s303, 128
          %s305 = scalar_lea.hbm %s3, %s304
          %s307 = sshll.u32 %s295, 4
          %s308 = int_to_ptr.vmem [resolvable:$true] %s307
          %310 = dma.vmem_to_hbm [thread:$0]  %s308, 128, %s305, %s292
        $region44: #{tpu_custom_call.1} parent=31 // pred_fallthru
          _
      $region32: #{tpu_custom_call.1} parent=5 // pred_fallthru
        _
      %p311 = scmp.le.s32.totalorder 2, %s18
      // Predicated region
      $region45: #{tpu_custom_call.1} parent=5 // pred_check
        %p312 = pneg %p311
      $region46: #{tpu_custom_call.1} parent=5 // pred_check_branch
        %314 = sbr.rel (%p312) target = $region48
      $region47: #{tpu_custom_call.1} parent=5 // pred_region
        %s315 = ssub.s32 %s18, 2
        // Predicated region
        $region49: #{tpu_custom_call.1} parent=47 // pred_check
          %p316 = pneg %p141
        $region50: #{tpu_custom_call.1} parent=47 // pred_check_branch
          %318 = sbr.rel (%p316) target = $region52
        $region51: #{tpu_custom_call.1} parent=47 // pred_region
          %s319 = sand.u32 %s126, 1
          %s320 = scalar_lea.sflag [#allocation4], %s319
          %s321 = sand.u32 %s126, 1
          %s322 = smul.addr %s321, 8
          %s323 = scalar_lea.vmem [#allocation7], %s322
          %324 = dma.done %s320, 128
        $region52: #{tpu_custom_call.1} parent=47 // pred_fallthru
          _
      $region48: #{tpu_custom_call.1} parent=5 // pred_fallthru
        _
    $region6: #{tpu_custom_call.1} parent=1 // loop_footer
      %s22 = sadd.s32 1, %s18
    $region7: #{tpu_custom_call.1} parent=1 // loop_footer_branch
      %17 = sbr.rel target = $region3
    $region8: #{tpu_custom_call.1} parent=1 // loop_exit
      _
    %325 = vsyncpa [#allocation3], 1
    %s326 = scalar_lea.sflag [#allocation3], 1
    %327 = vsyncpa %s326, 1
    %328 = vsyncpa [#allocation6], 1
    %s329 = scalar_lea.sflag [#allocation6], 1
    %330 = vsyncpa %s329, 1
    %331 = vsyncpa [#allocation4], 1
    %s332 = scalar_lea.sflag [#allocation4], 1
    %333 = vsyncpa %s332, 1

</llo_original>
